<compile_context>
chip_gen: v5e
topology: v5e:2x2
jax: 0.10.0
libtpu: 0.0.40
codegen_flags: <defaults>
</compile_context>

<pallas_src>
import jax
import jax.numpy as jnp
import numpy as np
from jax.experimental import pallas as pl
from jax.experimental.pallas import tpu as pltpu

BN_EPS = 1e-5


# ---------------------------------------------------------------------------
# Kernel: one batch element per grid step
# ---------------------------------------------------------------------------
def _non_local_kernel(x_ref, w3_ref, b3_ref, alpha_ref, delta_ref, out_ref):
    """
    x_ref:     (1, P, C)  input features, channel-last (P = H*W)
    w3_ref:    (3, C)     rows = [w_theta, w_phi, w_g]   (1x1 conv C->1 weights)
    b3_ref:    (3, 1)     rows = [b_theta, b_phi, b_g]
    alpha_ref: (1, C)     folded conv-W * BN scale
    delta_ref: (1, C)     folded conv-W bias + BN shift
    out_ref:   (1, P, C)  z = x + alpha * y + delta
    """
    x = x_ref[0]                      # (P, C) f32
    inv_n = 1.0 / x.shape[0]          # static 1/N

    # 1x1-conv projections (C -> 1): VPU multiply + lane reduce.
    theta = jnp.sum(x * w3_ref[0:1, :], axis=-1, keepdims=True) + b3_ref[0:1, :]  # (P, 1)
    phi   = jnp.sum(x * w3_ref[1:2, :], axis=-1, keepdims=True) + b3_ref[1:2, :]  # (P, 1)
    g     = jnp.sum(x * w3_ref[2:3, :], axis=-1, keepdims=True) + b3_ref[2:3, :]  # (P, 1)

    # y = (theta @ phi^T / N) @ g  ==  theta * (phi·g / N)   (no N x N matrix)
    s = jnp.sum(phi * g, axis=0, keepdims=True) * inv_n      # (1, 1)
    y = theta * s                                            # (P, 1)

    # z = x + BN(conv_W(y))  with conv_W/BN folded into per-channel alpha/delta.
    out_ref[0] = x + y * alpha_ref[...] + delta_ref[...]


# ---------------------------------------------------------------------------
# Wrapper
# ---------------------------------------------------------------------------
def non_local_forward(x_nchw, params):
    B, C, H, W = x_nchw.shape
    P = H * W
    # NCHW -> (B, P, C): channels on the lane axis.
    x_pc = jnp.transpose(x_nchw.reshape(B, C, P), (0, 2, 1)).astype(jnp.float32)

    w3 = jnp.stack(
        [params["theta_w"], params["phi_w"], params["g_w"]], axis=0
    ).astype(jnp.float32)                                            # (3, C)
    b3 = jnp.stack(
        [params["theta_b"], params["phi_b"], params["g_b"]], axis=0
    ).reshape(3, 1).astype(jnp.float32)                              # (3, 1)

    # Fold Conv2d(1->C, 1x1) + BatchNorm2d(C) (eval) into alpha*y + delta.
    inv_std = jax.lax.rsqrt(params["bn_var"].astype(jnp.float32) + BN_EPS)
    alpha = (params["bn_gamma"] * inv_std * params["W_w"]).reshape(1, C).astype(jnp.float32)
    delta = (params["bn_gamma"] * inv_std * (params["W_b"] - params["bn_mean"])
             + params["bn_beta"]).reshape(1, C).astype(jnp.float32)

    out_pc = pl.pallas_call(
        _non_local_kernel,
        out_shape=jax.ShapeDtypeStruct((B, P, C), jnp.float32),
        grid_spec=pltpu.PrefetchScalarGridSpec(
            num_scalar_prefetch=0,
            grid=(B,),
            in_specs=[
                pl.BlockSpec((1, P, C), lambda b: (b, 0, 0)),   # x
                pl.BlockSpec((3, C), lambda b: (0, 0)),         # w3
                pl.BlockSpec((3, 1), lambda b: (0, 0)),         # b3
                pl.BlockSpec((1, C), lambda b: (0, 0)),         # alpha
                pl.BlockSpec((1, C), lambda b: (0, 0)),         # delta
            ],
            out_specs=pl.BlockSpec((1, P, C), lambda b: (b, 0, 0)),
        ),
        compiler_params=pltpu.CompilerParams(
            dimension_semantics=("parallel",)),
    )(x_pc, w3, b3, alpha, delta)

    # (B, P, C) -> NCHW
    return jnp.transpose(out_pc, (0, 2, 1)).reshape(B, C, H, W)


# ---------------------------------------------------------------------------
# Pure-JAX reference: literal translation of the PyTorch forward (builds the
# full N x N matrix f, exactly as torch does).
# ---------------------------------------------------------------------------
def reference_forward(x, params, eps=BN_EPS):
    hp = jax.lax.Precision.HIGHEST
    B, C, H, W = x.shape
    N = H * W
    xf = x.reshape(B, C, N).astype(jnp.float32)

    g_x = jnp.einsum("c,bcn->bn", params["g_w"], xf, precision=hp) + params["g_b"]
    theta_x = jnp.einsum("c,bcn->bn", params["theta_w"], xf, precision=hp) + params["theta_b"]
    phi_x = jnp.einsum("c,bcn->bn", params["phi_w"], xf, precision=hp) + params["phi_b"]

    f = theta_x[:, :, None] * phi_x[:, None, :]                  # (B, N, N)
    f_div_C = f / N
    y = jnp.einsum("bij,bj->bi", f_div_C, g_x, precision=hp)     # (B, N)
    y_img = y.reshape(B, 1, H, W)

    W_y = (params["W_w"][None, :, None, None] * y_img
           + params["W_b"][None, :, None, None])                 # (B, C, H, W)
    inv_std = jax.lax.rsqrt(params["bn_var"] + eps)
    W_y = (params["bn_gamma"][None, :, None, None]
           * (W_y - params["bn_mean"][None, :, None, None])
           * inv_std[None, :, None, None]
           + params["bn_beta"][None, :, None, None])
    return W_y + x


# ---------------------------------------------------------------------------
if __name__ == "__main__":
    key = jax.random.PRNGKey(0)
    ks = jax.random.split(key, 14)
    B, C, H, W = 2, 256, 16, 8          # in_channels=256, 16x8 feature map

    def rnd(k, shape, scale=1.0):
        return scale * jax.random.normal(k, shape, dtype=jnp.float32)

    params = {
        # theta / phi / g : Conv2d(C, 1, 1x1); weight (1,C,1,1) flattened to (C,)
        "theta_w": rnd(ks[0], (C,), 1.0 / np.sqrt(C)),
        "theta_b": rnd(ks[1], (), 0.1),
        "phi_w": rnd(ks[2], (C,), 1.0 / np.sqrt(C)),
        "phi_b": rnd(ks[3], (), 0.1),
        "g_w": rnd(ks[4], (C,), 1.0 / np.sqrt(C)),
        "g_b": rnd(ks[5], (), 0.1),
        # W[0] : Conv2d(1, C, 1x1); weight (C,1,1,1) flattened to (C,)
        "W_w": rnd(ks[6], (C,), 1.0),
        "W_b": rnd(ks[7], (C,), 0.1),
        # W[1] : BatchNorm2d(C), eval mode. NOTE: the PyTorch module initializes
        # gamma = beta = 0 (so W_y == 0 and z == x at init); non-trivial values
        # are used here so the test exercises the full data path.
        "bn_gamma": rnd(ks[8], (C,), 0.5),
        "bn_beta": rnd(ks[9], (C,), 0.1),
        "bn_mean": rnd(ks[10], (C,), 0.1),
        "bn_var": jnp.abs(rnd(ks[11], (C,), 0.3)) + 0.5,
    }

    x = jax.random.normal(ks[12], (B, C, H, W), dtype=jnp.float32)   # NCHW like torch

    out = jax.jit(non_local_forward)(x, params)
    out = jax.block_until_ready(out)

    ref = reference_forward(x, params)
    np.testing.assert_allclose(np.asarray(out), np.asarray(ref), rtol=1e-3, atol=1e-4)

    print("KERNEL_OK")
</pallas_src>

<mosaic_0001>
module attributes {stable_mosaic.version = 11 : i64} {
  func.func @_non_local_kernel(%arg0: i32, %arg1: memref<1x128x256xf32, #tpu.memory_space<vmem>>, %arg2: memref<3x256xf32, #tpu.memory_space<vmem>>, %arg3: memref<3x1xf32, #tpu.memory_space<vmem>>, %arg4: memref<1x256xf32, #tpu.memory_space<vmem>>, %arg5: memref<1x256xf32, #tpu.memory_space<vmem>>, %arg6: memref<1x128x256xf32, #tpu.memory_space<vmem>>) attributes {dimension_semantics = [#tpu.dimension_semantics<parallel>], iteration_bounds = array<i64: 2>, scalar_prefetch = 0 : i64, scratch_operands = 0 : i64, tpu.core_type = #tpu.core_type<tc>, window_params = [{transform_indices = @transform_0, window_bounds = array<i64: 1, 128, 256>}, {pipeline_mode = #tpu.pipeline_mode<synchronous>, transform_indices = @transform_1, window_bounds = array<i64: 3, 256>}, {pipeline_mode = #tpu.pipeline_mode<synchronous>, transform_indices = @transform_2, window_bounds = array<i64: 3, 1>}, {pipeline_mode = #tpu.pipeline_mode<synchronous>, transform_indices = @transform_3, window_bounds = array<i64: 1, 256>}, {pipeline_mode = #tpu.pipeline_mode<synchronous>, transform_indices = @transform_4, window_bounds = array<i64: 1, 256>}, {transform_indices = @transform_5, window_bounds = array<i64: 1, 128, 256>}]} {
    %c0 = arith.constant 0 : index
    %c0_0 = arith.constant 0 : index
    %c0_1 = arith.constant 0 : index
    %0 = vector.load %arg1[%c0, %c0_0, %c0_1] : memref<1x128x256xf32, #tpu.memory_space<vmem>>, vector<1x128x256xf32>
    %1 = vector.shape_cast %0 : vector<1x128x256xf32> to vector<128x256xf32>
    %c0_2 = arith.constant 0 : index
    %c0_3 = arith.constant 0 : index
    %2 = vector.load %arg2[%c0_2, %c0_3] : memref<3x256xf32, #tpu.memory_space<vmem>>, vector<1x256xf32>
    %3 = vector.broadcast %2 : vector<1x256xf32> to vector<128x256xf32>
    %4 = arith.mulf %1, %3 : vector<128x256xf32>
    %cst = arith.constant dense<0.000000e+00> : vector<128xf32>
    %5 = vector.multi_reduction <add>, %4, %cst [1] : vector<128x256xf32> to vector<128xf32>
    %6 = vector.shape_cast %5 : vector<128xf32> to vector<128x1xf32>
    %c0_4 = arith.constant 0 : index
    %c0_5 = arith.constant 0 : index
    %7 = vector.load %arg3[%c0_4, %c0_5] : memref<3x1xf32, #tpu.memory_space<vmem>>, vector<1x1xf32>
    %8 = vector.broadcast %7 : vector<1x1xf32> to vector<128x1xf32>
    %9 = arith.addf %6, %8 : vector<128x1xf32>
    %c1 = arith.constant 1 : index
    %c0_6 = arith.constant 0 : index
    %10 = vector.load %arg2[%c1, %c0_6] : memref<3x256xf32, #tpu.memory_space<vmem>>, vector<1x256xf32>
    %11 = vector.broadcast %10 : vector<1x256xf32> to vector<128x256xf32>
    %12 = arith.mulf %1, %11 : vector<128x256xf32>
    %cst_7 = arith.constant dense<0.000000e+00> : vector<128xf32>
    %13 = vector.multi_reduction <add>, %12, %cst_7 [1] : vector<128x256xf32> to vector<128xf32>
    %14 = vector.shape_cast %13 : vector<128xf32> to vector<128x1xf32>
    %c1_8 = arith.constant 1 : index
    %c0_9 = arith.constant 0 : index
    %15 = vector.load %arg3[%c1_8, %c0_9] : memref<3x1xf32, #tpu.memory_space<vmem>>, vector<1x1xf32>
    %16 = vector.broadcast %15 : vector<1x1xf32> to vector<128x1xf32>
    %17 = arith.addf %14, %16 : vector<128x1xf32>
    %c2 = arith.constant 2 : index
    %c0_10 = arith.constant 0 : index
    %18 = vector.load %arg2[%c2, %c0_10] : memref<3x256xf32, #tpu.memory_space<vmem>>, vector<1x256xf32>
    %19 = vector.broadcast %18 : vector<1x256xf32> to vector<128x256xf32>
    %20 = arith.mulf %1, %19 : vector<128x256xf32>
    %cst_11 = arith.constant dense<0.000000e+00> : vector<128xf32>
    %21 = vector.multi_reduction <add>, %20, %cst_11 [1] : vector<128x256xf32> to vector<128xf32>
    %22 = vector.shape_cast %21 : vector<128xf32> to vector<128x1xf32>
    %c2_12 = arith.constant 2 : index
    %c0_13 = arith.constant 0 : index
    %23 = vector.load %arg3[%c2_12, %c0_13] : memref<3x1xf32, #tpu.memory_space<vmem>>, vector<1x1xf32>
    %24 = vector.broadcast %23 : vector<1x1xf32> to vector<128x1xf32>
    %25 = arith.addf %22, %24 : vector<128x1xf32>
    %26 = arith.mulf %17, %25 : vector<128x1xf32>
    %cst_14 = arith.constant dense<0.000000e+00> : vector<1xf32>
    %27 = vector.multi_reduction <add>, %26, %cst_14 [0] : vector<128x1xf32> to vector<1xf32>
    %28 = vector.shape_cast %27 : vector<1xf32> to vector<1x1xf32>
    %cst_15 = arith.constant 7.812500e-03 : f32
    %29 = vector.broadcast %cst_15 : f32 to vector<1x1xf32>
    %30 = arith.mulf %28, %29 : vector<1x1xf32>
    %31 = vector.broadcast %30 : vector<1x1xf32> to vector<128x1xf32>
    %32 = arith.mulf %9, %31 : vector<128x1xf32>
    %c0_16 = arith.constant 0 : index
    %c0_17 = arith.constant 0 : index
    %33 = vector.load %arg4[%c0_16, %c0_17] : memref<1x256xf32, #tpu.memory_space<vmem>>, vector<1x256xf32>
    %34 = vector.broadcast %32 : vector<128x1xf32> to vector<128x256xf32>
    %35 = vector.broadcast %33 : vector<1x256xf32> to vector<128x256xf32>
    %36 = arith.mulf %34, %35 : vector<128x256xf32>
    %37 = arith.addf %1, %36 : vector<128x256xf32>
    %c0_18 = arith.constant 0 : index
    %c0_19 = arith.constant 0 : index
    %38 = vector.load %arg5[%c0_18, %c0_19] : memref<1x256xf32, #tpu.memory_space<vmem>>, vector<1x256xf32>
    %39 = vector.broadcast %38 : vector<1x256xf32> to vector<128x256xf32>
    %40 = arith.addf %37, %39 : vector<128x256xf32>
    %c0_20 = arith.constant 0 : index
    %c0_21 = arith.constant 0 : index
    %c0_22 = arith.constant 0 : index
    %41 = vector.load %arg6[%c0_20, %c0_21, %c0_22] : memref<1x128x256xf32, #tpu.memory_space<vmem>>, vector<1x128x256xf32>
    %42 = vector.shape_cast %41 : vector<1x128x256xf32> to vector<128x256xf32>
    %43 = vector.shape_cast %40 : vector<128x256xf32> to vector<1x128x256xf32>
    tpu.vector_store %arg6[%c0_20, %c0_21, %c0_22], %43 {strides = array<i32>} : memref<1x128x256xf32, #tpu.memory_space<vmem>>, vector<1x128x256xf32>,
    return
  }
  func.func @transform_0(%arg0: i32) -> (i32, i32, i32) {
    %c0_i32 = arith.constant 0 : i32
    %c0_i32_0 = arith.constant 0 : i32
    %c0_i32_1 = arith.constant 0 : i32
    return %arg0, %c0_i32, %c0_i32_0 : i32, i32, i32
  }
  func.func @transform_1(%arg0: i32) -> (i32, i32) {
    %c0_i32 = arith.constant 0 : i32
    %c0_i32_0 = arith.constant 0 : i32
    %c0_i32_1 = arith.constant 0 : i32
    return %c0_i32, %c0_i32_0 : i32, i32
  }
  func.func @transform_2(%arg0: i32) -> (i32, i32) {
    %c0_i32 = arith.constant 0 : i32
    %c0_i32_0 = arith.constant 0 : i32
    %c0_i32_1 = arith.constant 0 : i32
    return %c0_i32, %c0_i32_0 : i32, i32
  }
  func.func @transform_3(%arg0: i32) -> (i32, i32) {
    %c0_i32 = arith.constant 0 : i32
    %c0_i32_0 = arith.constant 0 : i32
    %c0_i32_1 = arith.constant 0 : i32
    return %c0_i32, %c0_i32_0 : i32, i32
  }
  func.func @transform_4(%arg0: i32) -> (i32, i32) {
    %c0_i32 = arith.constant 0 : i32
    %c0_i32_0 = arith.constant 0 : i32
    %c0_i32_1 = arith.constant 0 : i32
    return %c0_i32, %c0_i32_0 : i32, i32
  }
  func.func @transform_5(%arg0: i32) -> (i32, i32, i32) {
    %c0_i32 = arith.constant 0 : i32
    %c0_i32_0 = arith.constant 0 : i32
    %c0_i32_1 = arith.constant 0 : i32
    return %arg0, %c0_i32, %c0_i32_0 : i32, i32, i32
  }
}

</mosaic_0001>

<llo_original>
// kernel: non_local_forward.1
$region0: #{non_local_forward.1}
  #allocation0 [shape = 'u32[]', space=smem, size = 0x4, offset = 0x4, fixed_abs, tag = 'smem constant byte address 0x4 - core index']
  #allocation1 [shape = 'u32[72,128]{1,0:T(1,128)}', space=vmem, size = 0x9000, scoped, tag = 'internal scratch']
  %s0 = inlined_call_operand.hbm [shape: f32[2,128,256], index: 0, kind: input, shape index: {}]
  %s1 = inlined_call_operand.vmem [shape: f32[3,256], index: 1, kind: input, shape index: {}]
  %s2 = inlined_call_operand.vmem [shape: f32[3,1], index: 2, kind: input, shape index: {}]
  %s3 = inlined_call_operand.vmem [shape: f32[1,256], index: 3, kind: input, shape index: {}]
  %s4 = inlined_call_operand.vmem [shape: f32[1,256], index: 4, kind: input, shape index: {}]
  %s5 = inlined_call_operand.hbm [shape: f32[2,128,256], index: 5, kind: output, shape index: {}]
  %s6 = sld [smem:[#allocation0]]
  $region57: #{non_local_forward.1} parent=0
    _
  %s8 = ssub.s32 1, %s6
  %s9 = scalar_select 0, %s8, %s6
  $region1: #{non_local_forward.1} parent=0
    #allocation2 [shape = 'u8[262144]{0}', space=vmem, size = 0x40000, scoped, tag = 'input window, operand 0']
    #allocation3 [shape = 's32[2]{0}', space=sflag, size = 0x8, scoped, tag = 'scoped memory for non_local_forward.1']
    #allocation4 [shape = 's32[2]{0}', space=sflag, size = 0x8, scoped, tag = 'scoped memory for non_local_forward.1']
    #allocation5 [shape = 'u8[262144]{0}', space=vmem, size = 0x40000, scoped, tag = 'output window, operand 0']
    %10 = vsyncpa [#allocation3], 0
    %s11 = scalar_lea.sflag [#allocation3], 1
    %12 = vsyncpa %s11, 0
    %13 = vsyncpa [#allocation4], 0
    %s14 = scalar_lea.sflag [#allocation4], 1
    %15 = vsyncpa %s14, 0
    loop: start=0, step=1, limit=4
    $region2: #{non_local_forward.1} parent=1 // loop_pre_header
      _
    $region3: #{non_local_forward.1} parent=1 // loop_header
      %s17 = sphi 0, %s21
      %p18 = scmp.ge.s32.totalorder %s17, 4
      %s27 = sphi 0, %s29
      %s30 = sphi 0, %s27
      %s31 = sphi 0, %s30
      %s47 = sphi 0, %s31
      %s51 = sphi 0, %s51
      %s53 = sphi 0, %s51
      %s54 = sphi 0, %s53
      %s68 = sphi 0, %s54
      %s72 = sphi 0, %s72
      %s74 = sphi 0, %s72
      %s75 = sphi 0, %s74
      %s89 = sphi 0, %s75
      %s93 = sphi 0, %s93
      %s95 = sphi 0, %s93
      %s96 = sphi 0, %s95
      %s110 = sphi 0, %s96
      %s114 = sphi 0, %s114
      %s116 = sphi 0, %s114
      %s117 = sphi 0, %s116
      %s131 = sphi 0, %s117
      %s137 = sphi 0, %s139
      %s140 = sphi 0, %s137
      %s141 = sphi 0, %s140
      %s157 = sphi 0, %s141
    $region4: #{non_local_forward.1} parent=1 // loop_header_branch
      %20 = sbr.rel (%p18) target = $region8
    $region5: #{non_local_forward.1} parent=1 // loop_body
      %s22 = ssub.s32 %s17, 1
      %s23 = ssub.s32 %s17, 2
      %s24 = sadd.s32 %s17, 1
      %s25 = ssub.s32 %s17, %s24
      %p26 = scmp.eq.s32.totalorder %s25, 0
      %s28 = sadd.s32 %s27, 1
      %s29 = scalar_select %p26, %s27, %s28
      %p32 = pneg %p26
      %p33 = scmp.eq.s32.totalorder %s17, 1
      %p34 = por %p32, %p33
      %p35 = scmp.ne.s32.totalorder %s27, %s30
      %p36 = scmp.eq.s32.totalorder %s17, 0
      %p37 = por %p35, %p36
      %p38 = scmp.ne.s32.totalorder %s27, %s30
      %p39 = scmp.eq.s32.totalorder %s22, 1
      %p40 = por %p38, %p39
      %p41 = scmp.ne.s32.totalorder %s30, %s31
      %p42 = scmp.eq.s32.totalorder %s22, 0
      %p43 = por %p41, %p42
      %p44 = scmp.ne.s32.totalorder %s30, %s31
      %p45 = scmp.eq.s32.totalorder %s23, 1
      %p46 = por %p44, %p45
      %p48 = scmp.ne.s32.totalorder %s31, %s47
      %p49 = scmp.eq.s32.totalorder %s23, 0
      %p50 = por %p48, %p49
      %s52 = sadd.s32 %s51, 1
      %p55 = scmp.eq.s32.totalorder %s17, 1
      %p56 = scmp.ne.s32.totalorder %s51, %s53
      %p57 = scmp.eq.s32.totalorder %s17, 0
      %p58 = por %p56, %p57
      %p59 = scmp.ne.s32.totalorder %s51, %s53
      %p60 = scmp.eq.s32.totalorder %s22, 1
      %p61 = por %p59, %p60
      %p62 = scmp.ne.s32.totalorder %s53, %s54
      %p63 = scmp.eq.s32.totalorder %s22, 0
      %p64 = por %p62, %p63
      %p65 = scmp.ne.s32.totalorder %s53, %s54
      %p66 = scmp.eq.s32.totalorder %s23, 1
      %p67 = por %p65, %p66
      %p69 = scmp.ne.s32.totalorder %s54, %s68
      %p70 = scmp.eq.s32.totalorder %s23, 0
      %p71 = por %p69, %p70
      %s73 = sadd.s32 %s72, 1
      %p76 = scmp.eq.s32.totalorder %s17, 1
      %p77 = scmp.ne.s32.totalorder %s72, %s74
      %p78 = scmp.eq.s32.totalorder %s17, 0
      %p79 = por %p77, %p78
      %p80 = scmp.ne.s32.totalorder %s72, %s74
      %p81 = scmp.eq.s32.totalorder %s22, 1
      %p82 = por %p80, %p81
      %p83 = scmp.ne.s32.totalorder %s74, %s75
      %p84 = scmp.eq.s32.totalorder %s22, 0
      %p85 = por %p83, %p84
      %p86 = scmp.ne.s32.totalorder %s74, %s75
      %p87 = scmp.eq.s32.totalorder %s23, 1
      %p88 = por %p86, %p87
      %p90 = scmp.ne.s32.totalorder %s75, %s89
      %p91 = scmp.eq.s32.totalorder %s23, 0
      %p92 = por %p90, %p91
      %s94 = sadd.s32 %s93, 1
      %p97 = scmp.eq.s32.totalorder %s17, 1
      %p98 = scmp.ne.s32.totalorder %s93, %s95
      %p99 = scmp.eq.s32.totalorder %s17, 0
      %p100 = por %p98, %p99
      %p101 = scmp.ne.s32.totalorder %s93, %s95
      %p102 = scmp.eq.s32.totalorder %s22, 1
      %p103 = por %p101, %p102
      %p104 = scmp.ne.s32.totalorder %s95, %s96
      %p105 = scmp.eq.s32.totalorder %s22, 0
      %p106 = por %p104, %p105
      %p107 = scmp.ne.s32.totalorder %s95, %s96
      %p108 = scmp.eq.s32.totalorder %s23, 1
      %p109 = por %p107, %p108
      %p111 = scmp.ne.s32.totalorder %s96, %s110
      %p112 = scmp.eq.s32.totalorder %s23, 0
      %p113 = por %p111, %p112
      %s115 = sadd.s32 %s114, 1
      %p118 = scmp.eq.s32.totalorder %s17, 1
      %p119 = scmp.ne.s32.totalorder %s114, %s116
      %p120 = scmp.eq.s32.totalorder %s17, 0
      %p121 = por %p119, %p120
      %p122 = scmp.ne.s32.totalorder %s114, %s116
      %p123 = scmp.eq.s32.totalorder %s22, 1
      %p124 = por %p122, %p123
      %p125 = scmp.ne.s32.totalorder %s116, %s117
      %p126 = scmp.eq.s32.totalorder %s22, 0
      %p127 = por %p125, %p126
      %p128 = scmp.ne.s32.totalorder %s116, %s117
      %p129 = scmp.eq.s32.totalorder %s23, 1
      %p130 = por %p128, %p129
      %p132 = scmp.ne.s32.totalorder %s117, %s131
      %p133 = scmp.eq.s32.totalorder %s23, 0
      %p134 = por %p132, %p133
      %s135 = ssub.s32 %s17, %s24
      %p136 = scmp.eq.s32.totalorder %s135, 0
      %s138 = sadd.s32 %s137, 1
      %s139 = scalar_select %p136, %s137, %s138
      %p142 = pneg %p136
      %p143 = scmp.eq.s32.totalorder %s17, 1
      %p144 = por %p142, %p143
      %p145 = scmp.ne.s32.totalorder %s137, %s140
      %p146 = scmp.eq.s32.totalorder %s17, 0
      %p147 = por %p145, %p146
      %p148 = scmp.ne.s32.totalorder %s137, %s140
      %p149 = scmp.eq.s32.totalorder %s22, 1
      %p150 = por %p148, %p149
      %p151 = scmp.ne.s32.totalorder %s140, %s141
      %p152 = scmp.eq.s32.totalorder %s22, 0
      %p153 = por %p151, %p152
      %p154 = scmp.ne.s32.totalorder %s140, %s141
      %p155 = scmp.eq.s32.totalorder %s23, 1
      %p156 = por %p154, %p155
      %p158 = scmp.ne.s32.totalorder %s141, %s157
      %p159 = scmp.eq.s32.totalorder %s23, 0
      %p160 = por %p158, %p159
      %p161 = scmp.le.s32.totalorder 1, %s17
      %p162 = scmp.lt.s32.totalorder %s17, 3
      %p163 = pnand %p161, %p162
      %p164 = pneg %p163
      // Predicated region
      $region9: #{non_local_forward.1} parent=5 // pred_check
        _
      $region10: #{non_local_forward.1} parent=5 // pred_check_branch
        %166 = sbr.rel (%p163) target = $region12
      $region11: #{non_local_forward.1} parent=5 // pred_region
        %s167 = ssub.s32 %s17, 1
        // Predicated region
        $region13: #{non_local_forward.1} parent=11 // pred_check
          %p168 = pneg %p64
        $region14: #{non_local_forward.1} parent=11 // pred_check_branch
          %170 = sbr.rel (%p168) target = $region16
        $region15: #{non_local_forward.1} parent=11 // pred_region
          _
        $region16: #{non_local_forward.1} parent=11 // pred_fallthru
          _
        // Predicated region
        $region17: #{non_local_forward.1} parent=11 // pred_check
          %p171 = pneg %p85
        $region18: #{non_local_forward.1} parent=11 // pred_check_branch
          %173 = sbr.rel (%p171) target = $region20
        $region19: #{non_local_forward.1} parent=11 // pred_region
          _
        $region20: #{non_local_forward.1} parent=11 // pred_fallthru
          _
        // Predicated region
        $region21: #{non_local_forward.1} parent=11 // pred_check
          %p174 = pneg %p106
        $region22: #{non_local_forward.1} parent=11 // pred_check_branch
          %176 = sbr.rel (%p174) target = $region24
        $region23: #{non_local_forward.1} parent=11 // pred_region
          _
        $region24: #{non_local_forward.1} parent=11 // pred_fallthru
          _
        // Predicated region
        $region25: #{non_local_forward.1} parent=11 // pred_check
          %p177 = pneg %p127
        $region26: #{non_local_forward.1} parent=11 // pred_check_branch
          %179 = sbr.rel (%p177) target = $region28
        $region27: #{non_local_forward.1} parent=11 // pred_region
          _
        $region28: #{non_local_forward.1} parent=11 // pred_fallthru
          _
      $region12: #{non_local_forward.1} parent=5 // pred_fallthru
        _
      %p180 = scmp.lt.s32.totalorder %s17, 2
      // Predicated region
      $region29: #{non_local_forward.1} parent=5 // pred_check
        %p181 = pneg %p180
      $region30: #{non_local_forward.1} parent=5 // pred_check_branch
        %183 = sbr.rel (%p181) target = $region32
      $region31: #{non_local_forward.1} parent=5 // pred_region
        // Predicated region
        $region33: #{non_local_forward.1} parent=31 // pred_check
          %p184 = pneg %p37
        $region34: #{non_local_forward.1} parent=31 // pred_check_branch
          %186 = sbr.rel (%p184) target = $region36
        $region35: #{non_local_forward.1} parent=31 // pred_region
          %s187 = sand.u32 %s27, 1
          %s188 = scalar_lea.sflag [#allocation3], %s187
          %s189 = sand.u32 %s27, 1
          %s190 = smul.addr %s189, 256
          %s191 = scalar_lea.vmem [#allocation2], %s190
          %193 = vsyncadd %s188, 0
          %s194 = smul.addr %s17, 32
          %s195 = smul.addr %s194, 8
          %s196 = scalar_lea.hbm %s0, %s195
          %s197 = sshll.u32 %s196, 4
          %s198 = int_to_ptr.hbm [resolvable:$true] %s197
          %s199 = sshll.u32 %s191, 4
          %s200 = int_to_ptr.vmem [resolvable:$true] %s199
          %205 = dma.hbm_to_vmem [thread:$0]  %s198, 4096, %s200, %s188, 256, 256, 16
        $region36: #{non_local_forward.1} parent=31 // pred_fallthru
          _
      $region32: #{non_local_forward.1} parent=5 // pred_fallthru
        _
      %p206 = scmp.le.s32.totalorder 1, %s17
      %p207 = scmp.lt.s32.totalorder %s17, 3
      %p208 = pnand %p206, %p207
      %p209 = pneg %p208
      // Predicated region
      $region37: #{non_local_forward.1} parent=5 // pred_check
        _
      $region38: #{non_local_forward.1} parent=5 // pred_check_branch
        %211 = sbr.rel (%p208) target = $region40
      $region39: #{non_local_forward.1} parent=5 // pred_region
        %s212 = ssub.s32 %s17, 1
        %s213 = sand.u32 %s30, 1
        %s214 = scalar_lea.sflag [#allocation3], %s213
        %s215 = sand.u32 %s30, 1
        %s216 = smul.addr %s215, 256
        %s217 = scalar_lea.vmem [#allocation2], %s216
        // Predicated region
        $region41: #{non_local_forward.1} parent=39 // pred_check
          %p218 = pneg %p43
        $region42: #{non_local_forward.1} parent=39 // pred_check_branch
          %220 = sbr.rel (%p218) target = $region44
        $region43: #{non_local_forward.1} parent=39 // pred_region
          %222 = dma.done %s214, 4096
        $region44: #{non_local_forward.1} parent=39 // pred_fallthru
          _
        %s223 = sand.u32 %s30, 1
        %s224 = scalar_lea.sflag [#allocation3], %s223
        %s225 = sand.u32 %s30, 1
        %s226 = smul.addr %s225, 256
        %s227 = scalar_lea.vmem [#allocation2], %s226
        %p228 = pneg %p43
        %p229 = pneg %p40
        %p230 = pneg %p64
        %p231 = pneg %p61
        %p232 = pneg %p85
        %p233 = pneg %p82
        %p234 = pneg %p106
        %p235 = pneg %p103
        %p236 = pneg %p127
        %p237 = pneg %p124
        %p238 = pneg %p153
        %p239 = pneg %p150
        %s240 = sand.u32 %s140, 1
        %s241 = scalar_lea.sflag [#allocation4], %s240
        %s242 = sand.u32 %s140, 1
        %s243 = smul.addr %s242, 256
        %s244 = scalar_lea.vmem [#allocation5], %s243
        %v245 = vld [vmem:[%s217] sm:$0xff]
        %v246 = vld [vmem:[%s217 + $0x8] sm:$0xff]
        %v247 = vld [vmem:[%s217 + $0x10] sm:$0xff]
        %v248 = vld [vmem:[%s217 + $0x18] sm:$0xff]
        %v249 = vld [vmem:[%s217 + $0x20] sm:$0xff]
        %v250 = vld [vmem:[%s217 + $0x28] sm:$0xff]
        %v251 = vld [vmem:[%s217 + $0x30] sm:$0xff]
        %v252 = vld [vmem:[%s217 + $0x38] sm:$0xff]
        %v253 = vld [vmem:[%s217 + $0x40] sm:$0xff]
        %v254 = vld [vmem:[%s217 + $0x48] sm:$0xff]
        %v255 = vld [vmem:[%s217 + $0x50] sm:$0xff]
        %v256 = vld [vmem:[%s217 + $0x58] sm:$0xff]
        %v257 = vld [vmem:[%s217 + $0x60] sm:$0xff]
        %v258 = vld [vmem:[%s217 + $0x68] sm:$0xff]
        %v259 = vld [vmem:[%s217 + $0x70] sm:$0xff]
        %v260 = vld [vmem:[%s217 + $0x78] sm:$0xff]
        %v261 = vld [vmem:[%s217 + $0x80] sm:$0xff]
        %v262 = vld [vmem:[%s217 + $0x88] sm:$0xff]
        %v263 = vld [vmem:[%s217 + $0x90] sm:$0xff]
        %v264 = vld [vmem:[%s217 + $0x98] sm:$0xff]
        %v265 = vld [vmem:[%s217 + $0xa0] sm:$0xff]
        %v266 = vld [vmem:[%s217 + $0xa8] sm:$0xff]
        %v267 = vld [vmem:[%s217 + $0xb0] sm:$0xff]
        %v268 = vld [vmem:[%s217 + $0xb8] sm:$0xff]
        %v269 = vld [vmem:[%s217 + $0xc0] sm:$0xff]
        %v270 = vld [vmem:[%s217 + $0xc8] sm:$0xff]
        %v271 = vld [vmem:[%s217 + $0xd0] sm:$0xff]
        %v272 = vld [vmem:[%s217 + $0xd8] sm:$0xff]
        %v273 = vld [vmem:[%s217 + $0xe0] sm:$0xff]
        %v274 = vld [vmem:[%s217 + $0xe8] sm:$0xff]
        %v275 = vld [vmem:[%s217 + $0xf0] sm:$0xff]
        %v276 = vld [vmem:[%s217 + $0xf8] sm:$0xff]
        %v277 = vld [vmem:[%s1] ss:$4 sm:$0x3]
        %v279 = vperm.slane %v277, 0
        %v280 = vperm.slane %v277, 1
        %v283 = vmul.f32 %v245, %v279
        %v284 = vmul.f32 %v246, %v280
        %v285 = vmul.f32 %v247, %v279
        %v286 = vmul.f32 %v248, %v280
        %v287 = vmul.f32 %v249, %v279
        %v288 = vmul.f32 %v250, %v280
        %v289 = vmul.f32 %v251, %v279
        %v290 = vmul.f32 %v252, %v280
        %v291 = vmul.f32 %v253, %v279
        %v292 = vmul.f32 %v254, %v280
        %v293 = vmul.f32 %v255, %v279
        %v294 = vmul.f32 %v256, %v280
        %v295 = vmul.f32 %v257, %v279
        %v296 = vmul.f32 %v258, %v280
        %v297 = vmul.f32 %v259, %v279
        %v298 = vmul.f32 %v260, %v280
        %v299 = vmul.f32 %v261, %v279
        %v300 = vmul.f32 %v262, %v280
        %v301 = vmul.f32 %v263, %v279
        %v302 = vmul.f32 %v264, %v280
        %v303 = vmul.f32 %v265, %v279
        %v304 = vmul.f32 %v266, %v280
        %v305 = vmul.f32 %v267, %v279
        %v306 = vmul.f32 %v268, %v280
        %v307 = vmul.f32 %v269, %v279
        %v308 = vmul.f32 %v270, %v280
        %v309 = vmul.f32 %v271, %v279
        %v310 = vmul.f32 %v272, %v280
        %v311 = vmul.f32 %v273, %v279
        %v312 = vmul.f32 %v274, %v280
        %v313 = vmul.f32 %v275, %v279
        %v314 = vmul.f32 %v276, %v280
        %v315 = vadd.f32 %v283, %v284
        %316 = vadd.xlane.f32.xlu0 %v315
        %v317 = vpop.xlane.xlu0 %316
        %v318 = vadd.f32 %v285, %v286
        %319 = vadd.xlane.f32.xlu0 %v318
        %v320 = vpop.xlane.xlu0 %319
        %v321 = vadd.f32 %v287, %v288
        %322 = vadd.xlane.f32.xlu0 %v321
        %v323 = vpop.xlane.xlu0 %322
        %v324 = vadd.f32 %v289, %v290
        %325 = vadd.xlane.f32.xlu0 %v324
        %v326 = vpop.xlane.xlu0 %325
        %v327 = vadd.f32 %v291, %v292
        %328 = vadd.xlane.f32.xlu0 %v327
        %v329 = vpop.xlane.xlu0 %328
        %v330 = vadd.f32 %v293, %v294
        %331 = vadd.xlane.f32.xlu0 %v330
        %v332 = vpop.xlane.xlu0 %331
        %v333 = vadd.f32 %v295, %v296
        %334 = vadd.xlane.f32.xlu0 %v333
        %v335 = vpop.xlane.xlu0 %334
        %v336 = vadd.f32 %v297, %v298
        %337 = vadd.xlane.f32.xlu0 %v336
        %v338 = vpop.xlane.xlu0 %337
        %v339 = vadd.f32 %v299, %v300
        %340 = vadd.xlane.f32.xlu0 %v339
        %v341 = vpop.xlane.xlu0 %340
        %v342 = vadd.f32 %v301, %v302
        %343 = vadd.xlane.f32.xlu0 %v342
        %v344 = vpop.xlane.xlu0 %343
        %v345 = vadd.f32 %v303, %v304
        %346 = vadd.xlane.f32.xlu0 %v345
        %v347 = vpop.xlane.xlu0 %346
        %v348 = vadd.f32 %v305, %v306
        %349 = vadd.xlane.f32.xlu0 %v348
        %v350 = vpop.xlane.xlu0 %349
        %v351 = vadd.f32 %v307, %v308
        %352 = vadd.xlane.f32.xlu0 %v351
        %v353 = vpop.xlane.xlu0 %352
        %v354 = vadd.f32 %v309, %v310
        %355 = vadd.xlane.f32.xlu0 %v354
        %v356 = vpop.xlane.xlu0 %355
        %v357 = vadd.f32 %v311, %v312
        %358 = vadd.xlane.f32.xlu0 %v357
        %v359 = vpop.xlane.xlu0 %358
        %v360 = vadd.f32 %v313, %v314
        %361 = vadd.xlane.f32.xlu0 %v360
        %v362 = vpop.xlane.xlu0 %361
        %v363 = vld [vmem:[%s2] sm:$0x1]
        %v364 = vperm.slane %v363, 0
        %v365 = vadd.f32 %v317, %v364
        %v366 = vadd.f32 %v320, %v364
        %v367 = vadd.f32 %v323, %v364
        %v368 = vadd.f32 %v326, %v364
        %v369 = vadd.f32 %v329, %v364
        %v370 = vadd.f32 %v332, %v364
        %v371 = vadd.f32 %v335, %v364
        %v372 = vadd.f32 %v338, %v364
        %v373 = vadd.f32 %v341, %v364
        %v374 = vadd.f32 %v344, %v364
        %v375 = vadd.f32 %v347, %v364
        %v376 = vadd.f32 %v350, %v364
        %v377 = vadd.f32 %v353, %v364
        %v378 = vadd.f32 %v356, %v364
        %v379 = vadd.f32 %v359, %v364
        %v380 = vadd.f32 %v362, %v364
        %s381 = scalar_lea.vmem %s1, 1
        %v382 = vld [vmem:[%s381] ss:$4 sm:$0x3]
        %v384 = vperm.slane %v382, 0
        %v385 = vperm.slane %v382, 1
        %v388 = vmul.f32 %v245, %v384
        %v389 = vmul.f32 %v246, %v385
        %v390 = vmul.f32 %v247, %v384
        %v391 = vmul.f32 %v248, %v385
        %v392 = vmul.f32 %v249, %v384
        %v393 = vmul.f32 %v250, %v385
        %v394 = vmul.f32 %v251, %v384
        %v395 = vmul.f32 %v252, %v385
        %v396 = vmul.f32 %v253, %v384
        %v397 = vmul.f32 %v254, %v385
        %v398 = vmul.f32 %v255, %v384
        %v399 = vmul.f32 %v256, %v385
        %v400 = vmul.f32 %v257, %v384
        %v401 = vmul.f32 %v258, %v385
        %v402 = vmul.f32 %v259, %v384
        %v403 = vmul.f32 %v260, %v385
        %v404 = vmul.f32 %v261, %v384
        %v405 = vmul.f32 %v262, %v385
        %v406 = vmul.f32 %v263, %v384
        %v407 = vmul.f32 %v264, %v385
        %v408 = vmul.f32 %v265, %v384
        %v409 = vmul.f32 %v266, %v385
        %v410 = vmul.f32 %v267, %v384
        %v411 = vmul.f32 %v268, %v385
        %v412 = vmul.f32 %v269, %v384
        %v413 = vmul.f32 %v270, %v385
        %v414 = vmul.f32 %v271, %v384
        %v415 = vmul.f32 %v272, %v385
        %v416 = vmul.f32 %v273, %v384
        %v417 = vmul.f32 %v274, %v385
        %v418 = vmul.f32 %v275, %v384
        %v419 = vmul.f32 %v276, %v385
        %v420 = vadd.f32 %v388, %v389
        %421 = vadd.xlane.f32.xlu0 %v420
        %v422 = vpop.xlane.xlu0 %421
        %v423 = vadd.f32 %v390, %v391
        %424 = vadd.xlane.f32.xlu0 %v423
        %v425 = vpop.xlane.xlu0 %424
        %v426 = vadd.f32 %v392, %v393
        %427 = vadd.xlane.f32.xlu0 %v426
        %v428 = vpop.xlane.xlu0 %427
        %v429 = vadd.f32 %v394, %v395
        %430 = vadd.xlane.f32.xlu0 %v429
        %v431 = vpop.xlane.xlu0 %430
        %v432 = vadd.f32 %v396, %v397
        %433 = vadd.xlane.f32.xlu0 %v432
        %v434 = vpop.xlane.xlu0 %433
        %v435 = vadd.f32 %v398, %v399
        %436 = vadd.xlane.f32.xlu0 %v435
        %v437 = vpop.xlane.xlu0 %436
        %v438 = vadd.f32 %v400, %v401
        %439 = vadd.xlane.f32.xlu0 %v438
        %v440 = vpop.xlane.xlu0 %439
        %v441 = vadd.f32 %v402, %v403
        %442 = vadd.xlane.f32.xlu0 %v441
        %v443 = vpop.xlane.xlu0 %442
        %v444 = vadd.f32 %v404, %v405
        %445 = vadd.xlane.f32.xlu0 %v444
        %v446 = vpop.xlane.xlu0 %445
        %v447 = vadd.f32 %v406, %v407
        %448 = vadd.xlane.f32.xlu0 %v447
        %v449 = vpop.xlane.xlu0 %448
        %v450 = vadd.f32 %v408, %v409
        %451 = vadd.xlane.f32.xlu0 %v450
        %v452 = vpop.xlane.xlu0 %451
        %v453 = vadd.f32 %v410, %v411
        %454 = vadd.xlane.f32.xlu0 %v453
        %v455 = vpop.xlane.xlu0 %454
        %v456 = vadd.f32 %v412, %v413
        %457 = vadd.xlane.f32.xlu0 %v456
        %v458 = vpop.xlane.xlu0 %457
        %v459 = vadd.f32 %v414, %v415
        %460 = vadd.xlane.f32.xlu0 %v459
        %v461 = vpop.xlane.xlu0 %460
        %v462 = vadd.f32 %v416, %v417
        %463 = vadd.xlane.f32.xlu0 %v462
        %v464 = vpop.xlane.xlu0 %463
        %v465 = vadd.f32 %v418, %v419
        %466 = vadd.xlane.f32.xlu0 %v465
        %v467 = vpop.xlane.xlu0 %466
        %v468 = vld [vmem:[%s2 + $0x1] sm:$0x1]
        %v469 = vperm.slane %v468, 0
        %v470 = vadd.f32 %v422, %v469
        %v471 = vadd.f32 %v425, %v469
        %v472 = vadd.f32 %v428, %v469
        %v473 = vadd.f32 %v431, %v469
        %v474 = vadd.f32 %v434, %v469
        %v475 = vadd.f32 %v437, %v469
        %v476 = vadd.f32 %v440, %v469
        %v477 = vadd.f32 %v443, %v469
        %v478 = vadd.f32 %v446, %v469
        %v479 = vadd.f32 %v449, %v469
        %v480 = vadd.f32 %v452, %v469
        %v481 = vadd.f32 %v455, %v469
        %v482 = vadd.f32 %v458, %v469
        %v483 = vadd.f32 %v461, %v469
        %v484 = vadd.f32 %v464, %v469
        %v485 = vadd.f32 %v467, %v469
        %s486 = scalar_lea.vmem %s1, 2
        %v487 = vld [vmem:[%s486] ss:$4 sm:$0x3]
        %v489 = vperm.slane %v487, 0
        %v490 = vperm.slane %v487, 1
        %v493 = vmul.f32 %v245, %v489
        %v494 = vmul.f32 %v246, %v490
        %v495 = vmul.f32 %v247, %v489
        %v496 = vmul.f32 %v248, %v490
        %v497 = vmul.f32 %v249, %v489
        %v498 = vmul.f32 %v250, %v490
        %v499 = vmul.f32 %v251, %v489
        %v500 = vmul.f32 %v252, %v490
        %v501 = vmul.f32 %v253, %v489
        %v502 = vmul.f32 %v254, %v490
        %v503 = vmul.f32 %v255, %v489
        %v504 = vmul.f32 %v256, %v490
        %v505 = vmul.f32 %v257, %v489
        %v506 = vmul.f32 %v258, %v490
        %v507 = vmul.f32 %v259, %v489
        %v508 = vmul.f32 %v260, %v490
        %v509 = vmul.f32 %v261, %v489
        %v510 = vmul.f32 %v262, %v490
        %v511 = vmul.f32 %v263, %v489
        %v512 = vmul.f32 %v264, %v490
        %v513 = vmul.f32 %v265, %v489
        %v514 = vmul.f32 %v266, %v490
        %v515 = vmul.f32 %v267, %v489
        %v516 = vmul.f32 %v268, %v490
        %v517 = vmul.f32 %v269, %v489
        %v518 = vmul.f32 %v270, %v490
        %v519 = vmul.f32 %v271, %v489
        %v520 = vmul.f32 %v272, %v490
        %v521 = vmul.f32 %v273, %v489
        %v522 = vmul.f32 %v274, %v490
        %v523 = vmul.f32 %v275, %v489
        %v524 = vmul.f32 %v276, %v490
        %v525 = vadd.f32 %v493, %v494
        %526 = vadd.xlane.f32.xlu0 %v525
        %v527 = vpop.xlane.xlu0 %526
        %v528 = vadd.f32 %v495, %v496
        %529 = vadd.xlane.f32.xlu0 %v528
        %v530 = vpop.xlane.xlu0 %529
        %v531 = vadd.f32 %v497, %v498
        %532 = vadd.xlane.f32.xlu0 %v531
        %v533 = vpop.xlane.xlu0 %532
        %v534 = vadd.f32 %v499, %v500
        %535 = vadd.xlane.f32.xlu0 %v534
        %v536 = vpop.xlane.xlu0 %535
        %v537 = vadd.f32 %v501, %v502
        %538 = vadd.xlane.f32.xlu0 %v537
        %v539 = vpop.xlane.xlu0 %538
        %v540 = vadd.f32 %v503, %v504
        %541 = vadd.xlane.f32.xlu0 %v540
        %v542 = vpop.xlane.xlu0 %541
        %v543 = vadd.f32 %v505, %v506
        %544 = vadd.xlane.f32.xlu0 %v543
        %v545 = vpop.xlane.xlu0 %544
        %v546 = vadd.f32 %v507, %v508
        %547 = vadd.xlane.f32.xlu0 %v546
        %v548 = vpop.xlane.xlu0 %547
        %v549 = vadd.f32 %v509, %v510
        %550 = vadd.xlane.f32.xlu0 %v549
        %v551 = vpop.xlane.xlu0 %550
        %v552 = vadd.f32 %v511, %v512
        %553 = vadd.xlane.f32.xlu0 %v552
        %v554 = vpop.xlane.xlu0 %553
        %v555 = vadd.f32 %v513, %v514
        %556 = vadd.xlane.f32.xlu0 %v555
        %v557 = vpop.xlane.xlu0 %556
        %v558 = vadd.f32 %v515, %v516
        %559 = vadd.xlane.f32.xlu0 %v558
        %v560 = vpop.xlane.xlu0 %559
        %v561 = vadd.f32 %v517, %v518
        %562 = vadd.xlane.f32.xlu0 %v561
        %v563 = vpop.xlane.xlu0 %562
        %v564 = vadd.f32 %v519, %v520
        %565 = vadd.xlane.f32.xlu0 %v564
        %v566 = vpop.xlane.xlu0 %565
        %v567 = vadd.f32 %v521, %v522
        %568 = vadd.xlane.f32.xlu0 %v567
        %v569 = vpop.xlane.xlu0 %568
        %v570 = vadd.f32 %v523, %v524
        %571 = vadd.xlane.f32.xlu0 %v570
        %v572 = vpop.xlane.xlu0 %571
        %v573 = vld [vmem:[%s2 + $0x2] sm:$0x1]
        %v574 = vperm.slane %v573, 0
        %v575 = vadd.f32 %v527, %v574
        %v576 = vadd.f32 %v530, %v574
        %v577 = vadd.f32 %v533, %v574
        %v578 = vadd.f32 %v536, %v574
        %v579 = vadd.f32 %v539, %v574
        %v580 = vadd.f32 %v542, %v574
        %v581 = vadd.f32 %v545, %v574
        %v582 = vadd.f32 %v548, %v574
        %v583 = vadd.f32 %v551, %v574
        %v584 = vadd.f32 %v554, %v574
        %v585 = vadd.f32 %v557, %v574
        %v586 = vadd.f32 %v560, %v574
        %v587 = vadd.f32 %v563, %v574
        %v588 = vadd.f32 %v566, %v574
        %v589 = vadd.f32 %v569, %v574
        %v590 = vadd.f32 %v572, %v574
        %v591 = vmul.f32 %v470, %v575
        %v592 = vmul.f32 %v471, %v576
        %v593 = vmul.f32 %v472, %v577
        %v594 = vmul.f32 %v473, %v578
        %v595 = vmul.f32 %v474, %v579
        %v596 = vmul.f32 %v475, %v580
        %v597 = vmul.f32 %v476, %v581
        %v598 = vmul.f32 %v477, %v582
        %v599 = vmul.f32 %v478, %v583
        %v600 = vmul.f32 %v479, %v584
        %v601 = vmul.f32 %v480, %v585
        %v602 = vmul.f32 %v481, %v586
        %v603 = vmul.f32 %v482, %v587
        %v604 = vmul.f32 %v483, %v588
        %v605 = vmul.f32 %v484, %v589
        %v606 = vmul.f32 %v485, %v590
        %vm607 = vcmask 7168
        %v608 = vsel %vm607, %v591, 0.0
        %v609 = vsel %vm607, %v592, 0.0
        %v610 = vadd.f32 %v608, %v609
        %v611 = vsel %vm607, %v593, 0.0
        %v612 = vadd.f32 %v610, %v611
        %v613 = vsel %vm607, %v594, 0.0
        %v614 = vadd.f32 %v612, %v613
        %v615 = vsel %vm607, %v595, 0.0
        %v616 = vadd.f32 %v614, %v615
        %v617 = vsel %vm607, %v596, 0.0
        %v618 = vadd.f32 %v616, %v617
        %v619 = vsel %vm607, %v597, 0.0
        %v620 = vadd.f32 %v618, %v619
        %v621 = vsel %vm607, %v598, 0.0
        %v622 = vadd.f32 %v620, %v621
        %v623 = vsel %vm607, %v599, 0.0
        %v624 = vadd.f32 %v622, %v623
        %v625 = vsel %vm607, %v600, 0.0
        %v626 = vadd.f32 %v624, %v625
        %v627 = vsel %vm607, %v601, 0.0
        %v628 = vadd.f32 %v626, %v627
        %v629 = vsel %vm607, %v602, 0.0
        %v630 = vadd.f32 %v628, %v629
        %v631 = vsel %vm607, %v603, 0.0
        %v632 = vadd.f32 %v630, %v631
        %v633 = vsel %vm607, %v604, 0.0
        %v634 = vadd.f32 %v632, %v633
        %v635 = vsel %vm607, %v605, 0.0
        %v636 = vadd.f32 %v634, %v635
        %v637 = vsel %vm607, %v606, 0.0
        %v638 = vadd.f32 %v636, %v637
        %v639 = vrot.slane %v638, 4
        %v640 = vadd.f32 %v638, %v639
        %v641 = vrot.slane %v640, 2
        %v642 = vadd.f32 %v640, %v641
        %v643 = vrot.slane %v642, 1
        %v644 = vadd.f32 %v642, %v643
        %v645 = vmul.f32 %v644, 0.0078125
        %v646 = vmul.f32 %v365, %v645
        %v647 = vmul.f32 %v366, %v645
        %v648 = vmul.f32 %v367, %v645
        %v649 = vmul.f32 %v368, %v645
        %v650 = vmul.f32 %v369, %v645
        %v651 = vmul.f32 %v370, %v645
        %v652 = vmul.f32 %v371, %v645
        %v653 = vmul.f32 %v372, %v645
        %v654 = vmul.f32 %v373, %v645
        %v655 = vmul.f32 %v374, %v645
        %v656 = vmul.f32 %v375, %v645
        %v657 = vmul.f32 %v376, %v645
        %v658 = vmul.f32 %v377, %v645
        %v659 = vmul.f32 %v378, %v645
        %v660 = vmul.f32 %v379, %v645
        %v661 = vmul.f32 %v380, %v645
        %v662 = vld [vmem:[%s3] sm:$0x3]
        %664 = vset.pattern.permute.xlu0 0
        %665 = vperm.xlu0 %664, %v646
        %v666 = vpop.permute.xlu0 %665
        %669 = vset.pattern.permute.xlu0 0
        %670 = vperm.xlu0 %669, %v647
        %v671 = vpop.permute.xlu0 %670
        %674 = vset.pattern.permute.xlu0 0
        %675 = vperm.xlu0 %674, %v648
        %v676 = vpop.permute.xlu0 %675
        %679 = vset.pattern.permute.xlu0 0
        %680 = vperm.xlu0 %679, %v649
        %v681 = vpop.permute.xlu0 %680
        %684 = vset.pattern.permute.xlu0 0
        %685 = vperm.xlu0 %684, %v650
        %v686 = vpop.permute.xlu0 %685
        %689 = vset.pattern.permute.xlu0 0
        %690 = vperm.xlu0 %689, %v651
        %v691 = vpop.permute.xlu0 %690
        %694 = vset.pattern.permute.xlu0 0
        %695 = vperm.xlu0 %694, %v652
        %v696 = vpop.permute.xlu0 %695
        %699 = vset.pattern.permute.xlu0 0
        %700 = vperm.xlu0 %699, %v653
        %v701 = vpop.permute.xlu0 %700
        %704 = vset.pattern.permute.xlu0 0
        %705 = vperm.xlu0 %704, %v654
        %v706 = vpop.permute.xlu0 %705
        %709 = vset.pattern.permute.xlu0 0
        %710 = vperm.xlu0 %709, %v655
        %v711 = vpop.permute.xlu0 %710
        %714 = vset.pattern.permute.xlu0 0
        %715 = vperm.xlu0 %714, %v656
        %v716 = vpop.permute.xlu0 %715
        %719 = vset.pattern.permute.xlu0 0
        %720 = vperm.xlu0 %719, %v657
        %v721 = vpop.permute.xlu0 %720
        %724 = vset.pattern.permute.xlu0 0
        %725 = vperm.xlu0 %724, %v658
        %v726 = vpop.permute.xlu0 %725
        %729 = vset.pattern.permute.xlu0 0
        %730 = vperm.xlu0 %729, %v659
        %v731 = vpop.permute.xlu0 %730
        %734 = vset.pattern.permute.xlu0 0
        %735 = vperm.xlu0 %734, %v660
        %v736 = vpop.permute.xlu0 %735
        %739 = vset.pattern.permute.xlu0 0
        %740 = vperm.xlu0 %739, %v661
        %v741 = vpop.permute.xlu0 %740
        %v744 = vperm.slane %v662, 0
        %v745 = vperm.slane %v662, 1
        %v748 = vmul.f32 %v666, %v744
        %v749 = vmul.f32 %v666, %v745
        %v750 = vmul.f32 %v671, %v744
        %v751 = vmul.f32 %v671, %v745
        %v752 = vmul.f32 %v676, %v744
        %v753 = vmul.f32 %v676, %v745
        %v754 = vmul.f32 %v681, %v744
        %v755 = vmul.f32 %v681, %v745
        %v756 = vmul.f32 %v686, %v744
        %v757 = vmul.f32 %v686, %v745
        %v758 = vmul.f32 %v691, %v744
        %v759 = vmul.f32 %v691, %v745
        %v760 = vmul.f32 %v696, %v744
        %v761 = vmul.f32 %v696, %v745
        %v762 = vmul.f32 %v701, %v744
        %v763 = vmul.f32 %v701, %v745
        %v764 = vmul.f32 %v706, %v744
        %v765 = vmul.f32 %v706, %v745
        %v766 = vmul.f32 %v711, %v744
        %v767 = vmul.f32 %v711, %v745
        %v768 = vmul.f32 %v716, %v744
        %v769 = vmul.f32 %v716, %v745
        %v770 = vmul.f32 %v721, %v744
        %v771 = vmul.f32 %v721, %v745
        %v772 = vmul.f32 %v726, %v744
        %v773 = vmul.f32 %v726, %v745
        %v774 = vmul.f32 %v731, %v744
        %v775 = vmul.f32 %v731, %v745
        %v776 = vmul.f32 %v736, %v744
        %v777 = vmul.f32 %v736, %v745
        %v778 = vmul.f32 %v741, %v744
        %v779 = vmul.f32 %v741, %v745
        %v780 = vadd.f32 %v245, %v748
        %v781 = vadd.f32 %v246, %v749
        %v782 = vadd.f32 %v247, %v750
        %v783 = vadd.f32 %v248, %v751
        %v784 = vadd.f32 %v249, %v752
        %v785 = vadd.f32 %v250, %v753
        %v786 = vadd.f32 %v251, %v754
        %v787 = vadd.f32 %v252, %v755
        %v788 = vadd.f32 %v253, %v756
        %v789 = vadd.f32 %v254, %v757
        %v790 = vadd.f32 %v255, %v758
        %v791 = vadd.f32 %v256, %v759
        %v792 = vadd.f32 %v257, %v760
        %v793 = vadd.f32 %v258, %v761
        %v794 = vadd.f32 %v259, %v762
        %v795 = vadd.f32 %v260, %v763
        %v796 = vadd.f32 %v261, %v764
        %v797 = vadd.f32 %v262, %v765
        %v798 = vadd.f32 %v263, %v766
        %v799 = vadd.f32 %v264, %v767
        %v800 = vadd.f32 %v265, %v768
        %v801 = vadd.f32 %v266, %v769
        %v802 = vadd.f32 %v267, %v770
        %v803 = vadd.f32 %v268, %v771
        %v804 = vadd.f32 %v269, %v772
        %v805 = vadd.f32 %v270, %v773
        %v806 = vadd.f32 %v271, %v774
        %v807 = vadd.f32 %v272, %v775
        %v808 = vadd.f32 %v273, %v776
        %v809 = vadd.f32 %v274, %v777
        %v810 = vadd.f32 %v275, %v778
        %v811 = vadd.f32 %v276, %v779
        %v812 = vld [vmem:[%s4] sm:$0x3]
        %v814 = vperm.slane %v812, 0
        %v815 = vperm.slane %v812, 1
        %v818 = vadd.f32 %v780, %v814
        %v819 = vadd.f32 %v781, %v815
        %v820 = vadd.f32 %v782, %v814
        %v821 = vadd.f32 %v783, %v815
        %v822 = vadd.f32 %v784, %v814
        %v823 = vadd.f32 %v785, %v815
        %v824 = vadd.f32 %v786, %v814
        %v825 = vadd.f32 %v787, %v815
        %v826 = vadd.f32 %v788, %v814
        %v827 = vadd.f32 %v789, %v815
        %v828 = vadd.f32 %v790, %v814
        %v829 = vadd.f32 %v791, %v815
        %v830 = vadd.f32 %v792, %v814
        %v831 = vadd.f32 %v793, %v815
        %v832 = vadd.f32 %v794, %v814
        %v833 = vadd.f32 %v795, %v815
        %v834 = vadd.f32 %v796, %v814
        %v835 = vadd.f32 %v797, %v815
        %v836 = vadd.f32 %v798, %v814
        %v837 = vadd.f32 %v799, %v815
        %v838 = vadd.f32 %v800, %v814
        %v839 = vadd.f32 %v801, %v815
        %v840 = vadd.f32 %v802, %v814
        %v841 = vadd.f32 %v803, %v815
        %v842 = vadd.f32 %v804, %v814
        %v843 = vadd.f32 %v805, %v815
        %v844 = vadd.f32 %v806, %v814
        %v845 = vadd.f32 %v807, %v815
        %v846 = vadd.f32 %v808, %v814
        %v847 = vadd.f32 %v809, %v815
        %v848 = vadd.f32 %v810, %v814
        %v849 = vadd.f32 %v811, %v815
        %850 = vst [vmem:[%s244] sm:$0xff] %v818
        %851 = vst [vmem:[%s244 + $0x8] sm:$0xff] %v819
        %852 = vst [vmem:[%s244 + $0x10] sm:$0xff] %v820
        %853 = vst [vmem:[%s244 + $0x18] sm:$0xff] %v821
        %854 = vst [vmem:[%s244 + $0x20] sm:$0xff] %v822
        %855 = vst [vmem:[%s244 + $0x28] sm:$0xff] %v823
        %856 = vst [vmem:[%s244 + $0x30] sm:$0xff] %v824
        %857 = vst [vmem:[%s244 + $0x38] sm:$0xff] %v825
        %858 = vst [vmem:[%s244 + $0x40] sm:$0xff] %v826
        %859 = vst [vmem:[%s244 + $0x48] sm:$0xff] %v827
        %860 = vst [vmem:[%s244 + $0x50] sm:$0xff] %v828
        %861 = vst [vmem:[%s244 + $0x58] sm:$0xff] %v829
        %862 = vst [vmem:[%s244 + $0x60] sm:$0xff] %v830
        %863 = vst [vmem:[%s244 + $0x68] sm:$0xff] %v831
        %864 = vst [vmem:[%s244 + $0x70] sm:$0xff] %v832
        %865 = vst [vmem:[%s244 + $0x78] sm:$0xff] %v833
        %866 = vst [vmem:[%s244 + $0x80] sm:$0xff] %v834
        %867 = vst [vmem:[%s244 + $0x88] sm:$0xff] %v835
        %868 = vst [vmem:[%s244 + $0x90] sm:$0xff] %v836
        %869 = vst [vmem:[%s244 + $0x98] sm:$0xff] %v837
        %870 = vst [vmem:[%s244 + $0xa0] sm:$0xff] %v838
        %871 = vst [vmem:[%s244 + $0xa8] sm:$0xff] %v839
        %872 = vst [vmem:[%s244 + $0xb0] sm:$0xff] %v840
        %873 = vst [vmem:[%s244 + $0xb8] sm:$0xff] %v841
        %874 = vst [vmem:[%s244 + $0xc0] sm:$0xff] %v842
        %875 = vst [vmem:[%s244 + $0xc8] sm:$0xff] %v843
        %876 = vst [vmem:[%s244 + $0xd0] sm:$0xff] %v844
        %877 = vst [vmem:[%s244 + $0xd8] sm:$0xff] %v845
        %878 = vst [vmem:[%s244 + $0xe0] sm:$0xff] %v846
        %879 = vst [vmem:[%s244 + $0xe8] sm:$0xff] %v847
        %880 = vst [vmem:[%s244 + $0xf0] sm:$0xff] %v848
        %881 = vst [vmem:[%s244 + $0xf8] sm:$0xff] %v849
        %s882 = sand.u32 %s140, 1
        %s883 = scalar_lea.sflag [#allocation4], %s882
        %s884 = sand.u32 %s140, 1
        %s885 = smul.addr %s884, 256
        %s886 = scalar_lea.vmem [#allocation5], %s885
        // Predicated region
        $region45: #{non_local_forward.1} parent=39 // pred_check
          %p887 = pneg %p150
        $region46: #{non_local_forward.1} parent=39 // pred_check_branch
          %889 = sbr.rel (%p887) target = $region48
        $region47: #{non_local_forward.1} parent=39 // pred_region
          %891 = vsyncadd %s883, 0
          %s892 = smul.addr %s22, 32
          %s893 = smul.addr %s892, 8
          %s894 = scalar_lea.hbm %s5, %s893
          %s895 = sshll.u32 %s886, 4
          %s896 = int_to_ptr.vmem [resolvable:$true] %s895
          %s897 = sshll.u32 %s894, 4
          %s898 = int_to_ptr.hbm [resolvable:$true] %s897
          %903 = dma.vmem_to_hbm [thread:$0]  %s896, 4096, %s898, %s883, 256, 256, 16
        $region48: #{non_local_forward.1} parent=39 // pred_fallthru
          _
      $region40: #{non_local_forward.1} parent=5 // pred_fallthru
        _
      %p904 = scmp.le.s32.totalorder 2, %s17
      // Predicated region
      $region49: #{non_local_forward.1} parent=5 // pred_check
        %p905 = pneg %p904
      $region50: #{non_local_forward.1} parent=5 // pred_check_branch
        %907 = sbr.rel (%p905) target = $region52
      $region51: #{non_local_forward.1} parent=5 // pred_region
        %s908 = ssub.s32 %s17, 2
        // Predicated region
        $region53: #{non_local_forward.1} parent=51 // pred_check
          %p909 = pneg %p156
        $region54: #{non_local_forward.1} parent=51 // pred_check_branch
          %911 = sbr.rel (%p909) target = $region56
        $region55: #{non_local_forward.1} parent=51 // pred_region
          %s912 = sand.u32 %s141, 1
          %s913 = scalar_lea.sflag [#allocation4], %s912
          %s914 = sand.u32 %s141, 1
          %s915 = smul.addr %s914, 256
          %s916 = scalar_lea.vmem [#allocation5], %s915
          %918 = dma.done %s913, 4096
        $region56: #{non_local_forward.1} parent=51 // pred_fallthru
          _
      $region52: #{non_local_forward.1} parent=5 // pred_fallthru
        _
    $region6: #{non_local_forward.1} parent=1 // loop_footer
      %s21 = sadd.s32 1, %s17
    $region7: #{non_local_forward.1} parent=1 // loop_footer_branch
      %16 = sbr.rel target = $region3
    $region8: #{non_local_forward.1} parent=1 // loop_exit
      _
    %919 = vsyncpa [#allocation3], 1
    %s920 = scalar_lea.sflag [#allocation3], 1
    %921 = vsyncpa %s920, 1
    %922 = vsyncpa [#allocation4], 1
    %s923 = scalar_lea.sflag [#allocation4], 1
    %924 = vsyncpa %s923, 1

</llo_original>
